<compile_context>
chip_gen: v7x
topology: tpu7x:2x2x1
jax: 0.10.0
libtpu: 0.0.40
codegen_flags: <defaults>
</compile_context>

<pallas_src>
import functools

import jax
import jax.numpy as jnp
from jax.experimental import pallas as pl
from jax.experimental.pallas import tpu as pltpu

LANES = 128
SUBLANES = 8
MAX_BLOCK_ROWS = 1024   # (1024, 128) f32 block = 512 KiB per input per buffer


def _num_tensorcores():
    """2 on v7x (2 TCs/chip), else 1 (v5e/v6e are single-TC)."""
    try:
        kind = jax.devices()[0].device_kind.lower()
    except Exception:  # pragma: no cover - defensive
        return 1
    return 2 if ("v7" in kind or "7x" in kind) else 1


def _dice_bce_sums_kernel(p_ref, t_ref, out_ref,
                          acc_pt, acc_p, acc_t, acc_bce,
                          *, n_valid, block_elems, full_blocks, has_partial):
    """Accumulates [sum(sig(x)*t), sum(sig(x)), sum(t), sum(bce)] per core."""
    c = pl.program_id(0)                 # core / parallel axis
    i = pl.program_id(1)                 # sequential reduction axis
    nb_inner = pl.num_programs(1)
    b = c * nb_inner + i                 # logical block id (may exceed real count)

    @pl.when(i == 0)
    def _():
        acc_pt[...] = jnp.zeros_like(acc_pt)
        acc_p[...] = jnp.zeros_like(acc_p)
        acc_t[...] = jnp.zeros_like(acc_t)
        acc_bce[...] = jnp.zeros_like(acc_bce)

    x = p_ref[...].astype(jnp.float32)
    t = t_ref[...].astype(jnp.float32)

    # One exp per element, shared by sigmoid and the stable logits-form BCE.
    e = jnp.exp(-jnp.abs(x))
    inv = pl.reciprocal(1.0 + e, approx=False)
    p = jnp.where(x >= 0, 1.0, e) * inv                   # == sigmoid(x)
    # BCE = t*softplus(-x) + (1-t)*softplus(x) = log1p(e) + relu(x) - t*x
    bce = jnp.log1p(e) + jnp.maximum(x, 0.0) - t * x
    pt = p * t

    def fold(v):
        # Fold the (block_rows, 128) tile down to one (8, 128) vreg with
        # elementwise VPU adds (no cross-lane / XLU traffic).
        return v.reshape(-1, SUBLANES, LANES).sum(axis=0)

    def accumulate_fast():
        acc_pt[...] += fold(pt)
        acc_p[...] += fold(p)
        acc_t[...] += fold(t)
        acc_bce[...] += fold(bce)

    if has_partial:
        # Fast path: block consists entirely of valid elements.
        @pl.when(b < full_blocks)
        def _():
            accumulate_fast()

        # Slow path: partial (or duplicated beyond-the-end) block.  Mask by
        # global element index so padding / stale data never contaminates sums.
        @pl.when(b >= full_blocks)
        def _():
            row = jax.lax.broadcasted_iota(jnp.int32, x.shape, 0)
            lane = jax.lax.broadcasted_iota(jnp.int32, x.shape, 1)
            gidx = b * block_elems + row * LANES + lane
            mask = gidx < n_valid
            acc_pt[...] += fold(jnp.where(mask, pt, 0.0))
            acc_p[...] += fold(jnp.where(mask, p, 0.0))
            acc_t[...] += fold(jnp.where(mask, t, 0.0))
            acc_bce[...] += fold(jnp.where(mask, bce, 0.0))
    else:
        accumulate_fast()

    # Cross-lane reduce of 4 x (8,128) once, at this core's last step.
    @pl.when(i == nb_inner - 1)
    def _():
        out_ref[0, 0] = jnp.sum(acc_pt[...])
        out_ref[0, 1] = jnp.sum(acc_p[...])
        out_ref[0, 2] = jnp.sum(acc_t[...])
        out_ref[0, 3] = jnp.sum(acc_bce[...])


@functools.partial(jax.jit, static_argnames=("smooth",))
def dice_bce_loss(preds, targets, smooth=0.01):
    """preds: raw logits, targets: {0,1}; any shape & dtype (flattened)."""
    n = preds.size
    pf = preds.reshape(-1)          # native dtype, no wrapper up-cast
    tf = targets.reshape(-1)

    # Pad to a multiple of 8*128 so rows is a sublane multiple (the in-kernel
    # (rows,128)->(rows//8,8,128) fold needs it); padding is masked in-kernel.
    pad_to = SUBLANES * LANES
    n_pad = (-n) % pad_to
    if n_pad:
        pf = jnp.pad(pf, (0, n_pad))
        tf = jnp.pad(tf, (0, n_pad))
    rows = (n + n_pad) // LANES
    pf = pf.reshape(rows, LANES)
    tf = tf.reshape(rows, LANES)

    # Block sizing: full array if small, else 1024 rows (multiple of 8).
    # VMEM: 2 inputs x 2 buffers x 512 KiB + 4 x 4 KiB accumulators ~= 2 MiB.
    block_rows = rows if rows <= MAX_BLOCK_ROWS else MAX_BLOCK_ROWS
    block_elems = block_rows * LANES
    nb_total = pl.cdiv(rows, block_rows)       # real blocks

    ncores = _num_tensorcores()
    if nb_total < 2:
        ncores = 1                             # nothing to split
    nb_inner = pl.cdiv(nb_total, ncores)       # blocks per core
    full_blocks = n // block_elems             # blocks with no invalid element
    has_partial = full_blocks < ncores * nb_inner   # static Python bool

    def in_index(c, i):
        # Clamp so duplicated (beyond-the-end) grid steps re-read a valid
        # block; their contribution is zeroed by the in-kernel mask.
        return (jnp.minimum(c * nb_inner + i, nb_total - 1), 0)

    in_spec = pl.BlockSpec((block_rows, LANES), in_index)

    kernel = functools.partial(
        _dice_bce_sums_kernel,
        n_valid=n, block_elems=block_elems, full_blocks=full_blocks,
        has_partial=has_partial)

    if ncores > 1:
        # v7x: actually shard the leading axis across the two TensorCores.
        sems = (getattr(pltpu, "CORE_PARALLEL", "parallel"),
                getattr(pltpu, "ARBITRARY", "arbitrary"))
    else:
        sems = ("arbitrary", "arbitrary")

    partials = pl.pallas_call(
        kernel,
        out_shape=jax.ShapeDtypeStruct((ncores, 4), jnp.float32),
        grid=(ncores, nb_inner),
        in_specs=[in_spec, in_spec],
        out_specs=pl.BlockSpec((1, 4), lambda c, i: (c, 0),
                               memory_space=pltpu.SMEM),
        scratch_shapes=[pltpu.VMEM((SUBLANES, LANES), jnp.float32)] * 4,
        compiler_params=pltpu.CompilerParams(dimension_semantics=sems),
    )(pf, tf)

    sums = jnp.sum(partials, axis=0)
    intersection, sum_p, sum_t, sum_bce = sums[0], sums[1], sums[2], sums[3]
    dice_loss = 1.0 - (2.0 * intersection + smooth) / (sum_p + sum_t + smooth)
    bce = sum_bce / jnp.float32(n)
    return bce + dice_loss


def _reference(preds, targets, smooth=0.01):
    p = jax.nn.sigmoid(preds.astype(jnp.float32)).reshape(-1)
    t = targets.astype(jnp.float32).reshape(-1)
    inter = jnp.sum(p * t)
    dice = 1.0 - (2.0 * inter + smooth) / (jnp.sum(p) + jnp.sum(t) + smooth)
    bce = jnp.mean(-(t * jnp.log(p) + (1.0 - t) * jnp.log1p(-p)))
    return bce + dice


if __name__ == "__main__":
    key = jax.random.PRNGKey(0)
    k1, k2 = jax.random.split(key)

    # NCHW-shaped inputs, as a segmentation head would produce.
    preds = jax.random.normal(k1, (2, 4, 16, 16), dtype=jnp.float32)
    targets = (jax.random.uniform(k2, (2, 4, 16, 16)) > 0.5).astype(jnp.float32)

    loss = dice_bce_loss(preds, targets)
    jax.block_until_ready(loss)
    ref = _reference(preds, targets)
    assert jnp.allclose(loss, ref, atol=1e-5, rtol=1e-5), (loss, ref)

    # Ragged element count -> exercises the masked partial-block path.
    k3, k4 = jax.random.split(k1)
    preds2 = jax.random.normal(k3, (2, 3, 7, 11), dtype=jnp.float32)
    targets2 = (jax.random.uniform(k4, (2, 3, 7, 11)) > 0.5).astype(jnp.float32)
    loss2 = dice_bce_loss(preds2, targets2)
    jax.block_until_ready(loss2)
    ref2 = _reference(preds2, targets2)
    assert jnp.allclose(loss2, ref2, atol=1e-5, rtol=1e-5), (loss2, ref2)

    # Narrow-dtype targets ({0,1} is exact in bf16): streams half the bytes.
    loss3 = dice_bce_loss(preds, targets.astype(jnp.bfloat16))
    jax.block_until_ready(loss3)
    assert jnp.allclose(loss3, ref, atol=1e-5, rtol=1e-5), (loss3, ref)

    print("KERNEL_OK")
</pallas_src>

<mosaic_0001>
module attributes {stable_mosaic.version = 11 : i64} {
  func.func @_dice_bce_sums_kernel(%arg0: i32, %arg1: i32, %arg2: memref<16x128xf32, #tpu.memory_space<vmem>>, %arg3: memref<16x128xf32, #tpu.memory_space<vmem>>, %arg4: memref<1x4xf32, #tpu.memory_space<smem>>, %arg5: memref<8x128xf32, #tpu.memory_space<vmem>>, %arg6: memref<8x128xf32, #tpu.memory_space<vmem>>, %arg7: memref<8x128xf32, #tpu.memory_space<vmem>>, %arg8: memref<8x128xf32, #tpu.memory_space<vmem>>) attributes {dimension_semantics = [#tpu.dimension_semantics<arbitrary>, #tpu.dimension_semantics<arbitrary>], iteration_bounds = array<i64: 1, 1>, scalar_prefetch = 0 : i64, scratch_operands = 4 : i64, tpu.core_type = #tpu.core_type<tc>, window_params = [{transform_indices = @transform_0, window_bounds = array<i64: 16, 128>}, {transform_indices = @transform_1, window_bounds = array<i64: 16, 128>}, {transform_indices = @transform_2, window_bounds = array<i64: 1, 4>}]} {
    %c0_i32 = arith.constant 0 : i32
    %0 = arith.cmpi eq, %arg1, %c0_i32 : i32
    %1 = arith.extui %0 : i1 to i32
    %c0_i32_0 = arith.constant 0 : i32
    %2 = arith.cmpi ne, %1, %c0_i32_0 : i32
    scf.if %2 {
      %cst_30 = arith.constant 0.000000e+00 : f32
      %47 = vector.broadcast %cst_30 : f32 to vector<8x128xf32>
      %c0_31 = arith.constant 0 : index
      %c0_32 = arith.constant 0 : index
      %48 = vector.load %arg5[%c0_31, %c0_32] : memref<8x128xf32, #tpu.memory_space<vmem>>, vector<8x128xf32>
      tpu.vector_store %arg5[%c0_31, %c0_32], %47 {strides = array<i32>} : memref<8x128xf32, #tpu.memory_space<vmem>>, vector<8x128xf32>,
      %cst_33 = arith.constant 0.000000e+00 : f32
      %49 = vector.broadcast %cst_33 : f32 to vector<8x128xf32>
      %c0_34 = arith.constant 0 : index
      %c0_35 = arith.constant 0 : index
      %50 = vector.load %arg6[%c0_34, %c0_35] : memref<8x128xf32, #tpu.memory_space<vmem>>, vector<8x128xf32>
      tpu.vector_store %arg6[%c0_34, %c0_35], %49 {strides = array<i32>} : memref<8x128xf32, #tpu.memory_space<vmem>>, vector<8x128xf32>,
      %cst_36 = arith.constant 0.000000e+00 : f32
      %51 = vector.broadcast %cst_36 : f32 to vector<8x128xf32>
      %c0_37 = arith.constant 0 : index
      %c0_38 = arith.constant 0 : index
      %52 = vector.load %arg7[%c0_37, %c0_38] : memref<8x128xf32, #tpu.memory_space<vmem>>, vector<8x128xf32>
      tpu.vector_store %arg7[%c0_37, %c0_38], %51 {strides = array<i32>} : memref<8x128xf32, #tpu.memory_space<vmem>>, vector<8x128xf32>,
      %cst_39 = arith.constant 0.000000e+00 : f32
      %53 = vector.broadcast %cst_39 : f32 to vector<8x128xf32>
      %c0_40 = arith.constant 0 : index
      %c0_41 = arith.constant 0 : index
      %54 = vector.load %arg8[%c0_40, %c0_41] : memref<8x128xf32, #tpu.memory_space<vmem>>, vector<8x128xf32>
      tpu.vector_store %arg8[%c0_40, %c0_41], %53 {strides = array<i32>} : memref<8x128xf32, #tpu.memory_space<vmem>>, vector<8x128xf32>,
    } else {
    }
    %c0 = arith.constant 0 : index
    %c0_1 = arith.constant 0 : index
    %3 = vector.load %arg2[%c0, %c0_1] : memref<16x128xf32, #tpu.memory_space<vmem>>, vector<16x128xf32>
    %c0_2 = arith.constant 0 : index
    %c0_3 = arith.constant 0 : index
    %4 = vector.load %arg3[%c0_2, %c0_3] : memref<16x128xf32, #tpu.memory_space<vmem>>, vector<16x128xf32>
    %5 = math.absf %3 : vector<16x128xf32>
    %cst = arith.constant 0.000000e+00 : f32
    %6 = vector.broadcast %cst : f32 to vector<16x128xf32>
    %7 = arith.subf %6, %5 : vector<16x128xf32>
    %8 = math.exp %7 : vector<16x128xf32>
    %cst_4 = arith.constant 1.000000e+00 : f32
    %9 = vector.broadcast %cst_4 : f32 to vector<16x128xf32>
    %10 = arith.addf %9, %8 : vector<16x128xf32>
    %11 = tpu.reciprocal %10 : vector<16x128xf32> -> vector<16x128xf32>
    %cst_5 = arith.constant 0.000000e+00 : f32
    %12 = vector.broadcast %cst_5 : f32 to vector<16x128xf32>
    %13 = arith.cmpf oge, %3, %12 : vector<16x128xf32>
    %cst_6 = arith.constant 1.000000e+00 : f32
    %14 = vector.broadcast %cst_6 : f32 to vector<16x128xf32>
    %15 = arith.select %13, %14, %8 : vector<16x128xi1>, vector<16x128xf32>
    %16 = arith.mulf %15, %11 : vector<16x128xf32>
    %17 = math.log1p %8 : vector<16x128xf32>
    %cst_7 = arith.constant 0.000000e+00 : f32
    %18 = vector.broadcast %cst_7 : f32 to vector<16x128xf32>
    %19 = arith.maximumf %3, %18 : vector<16x128xf32>
    %20 = arith.addf %17, %19 : vector<16x128xf32>
    %21 = arith.mulf %4, %3 : vector<16x128xf32>
    %22 = arith.subf %20, %21 : vector<16x128xf32>
    %23 = arith.mulf %16, %4 : vector<16x128xf32>
    %c0_8 = arith.constant 0 : index
    %c0_9 = arith.constant 0 : index
    %24 = vector.load %arg5[%c0_8, %c0_9] : memref<8x128xf32, #tpu.memory_space<vmem>>, vector<8x128xf32>
    %25 = vector.shape_cast %23 : vector<16x128xf32> to vector<2x8x128xf32>
    %cst_10 = arith.constant dense<0.000000e+00> : vector<8x128xf32>
    %26 = vector.multi_reduction <add>, %25, %cst_10 [0] : vector<2x8x128xf32> to vector<8x128xf32>
    %27 = arith.addf %24, %26 : vector<8x128xf32>
    %c0_11 = arith.constant 0 : index
    %c0_12 = arith.constant 0 : index
    %28 = vector.load %arg5[%c0_11, %c0_12] : memref<8x128xf32, #tpu.memory_space<vmem>>, vector<8x128xf32>
    tpu.vector_store %arg5[%c0_11, %c0_12], %27 {strides = array<i32>} : memref<8x128xf32, #tpu.memory_space<vmem>>, vector<8x128xf32>,
    %c0_13 = arith.constant 0 : index
    %c0_14 = arith.constant 0 : index
    %29 = vector.load %arg6[%c0_13, %c0_14] : memref<8x128xf32, #tpu.memory_space<vmem>>, vector<8x128xf32>
    %30 = vector.shape_cast %16 : vector<16x128xf32> to vector<2x8x128xf32>
    %cst_15 = arith.constant dense<0.000000e+00> : vector<8x128xf32>
    %31 = vector.multi_reduction <add>, %30, %cst_15 [0] : vector<2x8x128xf32> to vector<8x128xf32>
    %32 = arith.addf %29, %31 : vector<8x128xf32>
    %c0_16 = arith.constant 0 : index
    %c0_17 = arith.constant 0 : index
    %33 = vector.load %arg6[%c0_16, %c0_17] : memref<8x128xf32, #tpu.memory_space<vmem>>, vector<8x128xf32>
    tpu.vector_store %arg6[%c0_16, %c0_17], %32 {strides = array<i32>} : memref<8x128xf32, #tpu.memory_space<vmem>>, vector<8x128xf32>,
    %c0_18 = arith.constant 0 : index
    %c0_19 = arith.constant 0 : index
    %34 = vector.load %arg7[%c0_18, %c0_19] : memref<8x128xf32, #tpu.memory_space<vmem>>, vector<8x128xf32>
    %35 = vector.shape_cast %4 : vector<16x128xf32> to vector<2x8x128xf32>
    %cst_20 = arith.constant dense<0.000000e+00> : vector<8x128xf32>
    %36 = vector.multi_reduction <add>, %35, %cst_20 [0] : vector<2x8x128xf32> to vector<8x128xf32>
    %37 = arith.addf %34, %36 : vector<8x128xf32>
    %c0_21 = arith.constant 0 : index
    %c0_22 = arith.constant 0 : index
    %38 = vector.load %arg7[%c0_21, %c0_22] : memref<8x128xf32, #tpu.memory_space<vmem>>, vector<8x128xf32>
    tpu.vector_store %arg7[%c0_21, %c0_22], %37 {strides = array<i32>} : memref<8x128xf32, #tpu.memory_space<vmem>>, vector<8x128xf32>,
    %c0_23 = arith.constant 0 : index
    %c0_24 = arith.constant 0 : index
    %39 = vector.load %arg8[%c0_23, %c0_24] : memref<8x128xf32, #tpu.memory_space<vmem>>, vector<8x128xf32>
    %40 = vector.shape_cast %22 : vector<16x128xf32> to vector<2x8x128xf32>
    %cst_25 = arith.constant dense<0.000000e+00> : vector<8x128xf32>
    %41 = vector.multi_reduction <add>, %40, %cst_25 [0] : vector<2x8x128xf32> to vector<8x128xf32>
    %42 = arith.addf %39, %41 : vector<8x128xf32>
    %c0_26 = arith.constant 0 : index
    %c0_27 = arith.constant 0 : index
    %43 = vector.load %arg8[%c0_26, %c0_27] : memref<8x128xf32, #tpu.memory_space<vmem>>, vector<8x128xf32>
    tpu.vector_store %arg8[%c0_26, %c0_27], %42 {strides = array<i32>} : memref<8x128xf32, #tpu.memory_space<vmem>>, vector<8x128xf32>,
    %c0_i32_28 = arith.constant 0 : i32
    %44 = arith.cmpi eq, %arg1, %c0_i32_28 : i32
    %45 = arith.extui %44 : i1 to i32
    %c0_i32_29 = arith.constant 0 : i32
    %46 = arith.cmpi ne, %45, %c0_i32_29 : i32
    scf.if %46 {
      %c0_30 = arith.constant 0 : index
      %c0_31 = arith.constant 0 : index
      %47 = vector.load %arg5[%c0_30, %c0_31] : memref<8x128xf32, #tpu.memory_space<vmem>>, vector<8x128xf32>
      %48 = vector.shape_cast %47 : vector<8x128xf32> to vector<1x8x128xf32>
      %cst_32 = arith.constant dense<0.000000e+00> : vector<1xf32>
      %49 = vector.multi_reduction <add>, %48, %cst_32 [1, 2] : vector<1x8x128xf32> to vector<1xf32>
      %50 = vector.shape_cast %49 : vector<1xf32> to vector<1x1x1xf32>
      %51 = vector.extract %50[0, 0, 0] : f32 from vector<1x1x1xf32>
      %c0_33 = arith.constant 0 : index
      %c0_34 = arith.constant 0 : index
      %52 = memref.load %arg4[%c0_33, %c0_34] : memref<1x4xf32, #tpu.memory_space<smem>>
      memref.store %51, %arg4[%c0_33, %c0_34] : memref<1x4xf32, #tpu.memory_space<smem>>
      %c0_35 = arith.constant 0 : index
      %c0_36 = arith.constant 0 : index
      %53 = vector.load %arg6[%c0_35, %c0_36] : memref<8x128xf32, #tpu.memory_space<vmem>>, vector<8x128xf32>
      %54 = vector.shape_cast %53 : vector<8x128xf32> to vector<1x8x128xf32>
      %cst_37 = arith.constant dense<0.000000e+00> : vector<1xf32>
      %55 = vector.multi_reduction <add>, %54, %cst_37 [1, 2] : vector<1x8x128xf32> to vector<1xf32>
      %56 = vector.shape_cast %55 : vector<1xf32> to vector<1x1x1xf32>
      %57 = vector.extract %56[0, 0, 0] : f32 from vector<1x1x1xf32>
      %c0_38 = arith.constant 0 : index
      %c1 = arith.constant 1 : index
      %58 = memref.load %arg4[%c0_38, %c1] : memref<1x4xf32, #tpu.memory_space<smem>>
      memref.store %57, %arg4[%c0_38, %c1] : memref<1x4xf32, #tpu.memory_space<smem>>
      %c0_39 = arith.constant 0 : index
      %c0_40 = arith.constant 0 : index
      %59 = vector.load %arg7[%c0_39, %c0_40] : memref<8x128xf32, #tpu.memory_space<vmem>>, vector<8x128xf32>
      %60 = vector.shape_cast %59 : vector<8x128xf32> to vector<1x8x128xf32>
      %cst_41 = arith.constant dense<0.000000e+00> : vector<1xf32>
      %61 = vector.multi_reduction <add>, %60, %cst_41 [1, 2] : vector<1x8x128xf32> to vector<1xf32>
      %62 = vector.shape_cast %61 : vector<1xf32> to vector<1x1x1xf32>
      %63 = vector.extract %62[0, 0, 0] : f32 from vector<1x1x1xf32>
      %c0_42 = arith.constant 0 : index
      %c2 = arith.constant 2 : index
      %64 = memref.load %arg4[%c0_42, %c2] : memref<1x4xf32, #tpu.memory_space<smem>>
      memref.store %63, %arg4[%c0_42, %c2] : memref<1x4xf32, #tpu.memory_space<smem>>
      %c0_43 = arith.constant 0 : index
      %c0_44 = arith.constant 0 : index
      %65 = vector.load %arg8[%c0_43, %c0_44] : memref<8x128xf32, #tpu.memory_space<vmem>>, vector<8x128xf32>
      %66 = vector.shape_cast %65 : vector<8x128xf32> to vector<1x8x128xf32>
      %cst_45 = arith.constant dense<0.000000e+00> : vector<1xf32>
      %67 = vector.multi_reduction <add>, %66, %cst_45 [1, 2] : vector<1x8x128xf32> to vector<1xf32>
      %68 = vector.shape_cast %67 : vector<1xf32> to vector<1x1x1xf32>
      %69 = vector.extract %68[0, 0, 0] : f32 from vector<1x1x1xf32>
      %c0_46 = arith.constant 0 : index
      %c3 = arith.constant 3 : index
      %70 = memref.load %arg4[%c0_46, %c3] : memref<1x4xf32, #tpu.memory_space<smem>>
      memref.store %69, %arg4[%c0_46, %c3] : memref<1x4xf32, #tpu.memory_space<smem>>
    } else {
    }
    return
  }
  func.func @transform_0(%arg0: i32, %arg1: i32) -> (i32, i32) {
    %c1_i32 = arith.constant 1 : i32
    %0 = arith.muli %arg0, %c1_i32 : i32
    %1 = arith.addi %0, %arg1 : i32
    %c0_i32 = arith.constant 0 : i32
    %2 = arith.minsi %1, %c0_i32 : i32
    %c0_i32_0 = arith.constant 0 : i32
    %c0_i32_1 = arith.constant 0 : i32
    return %2, %c0_i32_0 : i32, i32
  }
  func.func @transform_1(%arg0: i32, %arg1: i32) -> (i32, i32) {
    %c1_i32 = arith.constant 1 : i32
    %0 = arith.muli %arg0, %c1_i32 : i32
    %1 = arith.addi %0, %arg1 : i32
    %c0_i32 = arith.constant 0 : i32
    %2 = arith.minsi %1, %c0_i32 : i32
    %c0_i32_0 = arith.constant 0 : i32
    %c0_i32_1 = arith.constant 0 : i32
    return %2, %c0_i32_0 : i32, i32
  }
  func.func @transform_2(%arg0: i32, %arg1: i32) -> (i32, i32) {
    %c0_i32 = arith.constant 0 : i32
    %c0_i32_0 = arith.constant 0 : i32
    return %arg0, %c0_i32 : i32, i32
  }
}

</mosaic_0001>

<llo_original>
// kernel: dice_bce_loss.1
$region0: #{dice_bce_loss.1}
  #allocation0 [shape = 'u32[]', space=smem, size = 0x4, offset = 0x4, fixed_abs, tag = 'smem constant byte address 0x4 - core index']
  #allocation1 [shape = 'u32[144,128]{1,0:T(1,128)}', space=vmem, size = 0x12000, scoped, tag = 'internal scratch']
  #allocation2 [shape = 'f32[8,128]{1,0:T(8,128)}', space=vmem, size = 0x1000, scoped, tag = 'scratch operand']
  #allocation3 [shape = 'f32[8,128]{1,0:T(8,128)}', space=vmem, size = 0x1000, scoped, tag = 'scratch operand']
  #allocation4 [shape = 'f32[8,128]{1,0:T(8,128)}', space=vmem, size = 0x1000, scoped, tag = 'scratch operand']
  #allocation5 [shape = 'f32[8,128]{1,0:T(8,128)}', space=vmem, size = 0x1000, scoped, tag = 'scratch operand']
  %s0 = inlined_call_operand.vmem [shape: f32[16,128], index: 0, kind: input, shape index: {}]
  %s1 = inlined_call_operand.vmem [shape: f32[16,128], index: 1, kind: input, shape index: {}]
  %s2 = inlined_call_operand.vmem [shape: f32[1,4], index: 2, kind: output, shape index: {}]
  %s3 = sld [smem:[#allocation0]]
  $region26: #{dice_bce_loss.1} parent=0
    _
  %s5 = ssub.s32 1, %s3
  %s6 = scalar_select 0, %s5, %s3
  $region1: #{dice_bce_loss.1} parent=0
    #allocation6 [shape = 'u8[512]{0}', space=smem, size = 0x200, scoped, tag = 'output window, operand 0, single buffered']
    #allocation7 [shape = 's32[1]{0}', space=sflag, size = 0x4, scoped, tag = 'scoped memory for dice_bce_loss.1']
    %7 = vsyncpa [#allocation7], 0
    // Predicated region
    $region2: #{dice_bce_loss.1} parent=1 // pred_check
      _
    $region3: #{dice_bce_loss.1} parent=1 // pred_check_branch
      %9 = sbr.rel (0) target = $region5
    $region4: #{dice_bce_loss.1} parent=1 // pred_region
      %s10 = sadd.s32 0, 0
      %p11 = scmp.lt.s32.totalorder %s10, 0
      %s12 = scalar_select %p11, %s10, 0
      %s13 = smul.u32 2, %s12
      %p14 = scmp.lt.s32.totalorder %s13, 1
      %s15 = scalar_select %p14, %s13, 1
      %s16 = smul.addr %s15, 8
      %s17 = scalar_lea.vmem %s0, %s16
      %s18 = sadd.s32 0, 0
      %p19 = scmp.lt.s32.totalorder %s18, 0
      %s20 = scalar_select %p19, %s18, 0
      %s21 = smul.u32 2, %s20
    $region5: #{dice_bce_loss.1} parent=1 // pred_fallthru
      _
    // Predicated region
    $region6: #{dice_bce_loss.1} parent=1 // pred_check
      _
    $region7: #{dice_bce_loss.1} parent=1 // pred_check_branch
      %23 = sbr.rel (0) target = $region9
    $region8: #{dice_bce_loss.1} parent=1 // pred_region
      %s24 = sadd.s32 0, 0
      %p25 = scmp.lt.s32.totalorder %s24, 0
      %s26 = scalar_select %p25, %s24, 0
      %s27 = smul.u32 2, %s26
      %p28 = scmp.lt.s32.totalorder %s27, 1
      %s29 = scalar_select %p28, %s27, 1
      %s30 = smul.addr %s29, 8
      %s31 = scalar_lea.vmem %s1, %s30
      %s32 = sadd.s32 0, 0
      %p33 = scmp.lt.s32.totalorder %s32, 0
      %s34 = scalar_select %p33, %s32, 0
      %s35 = smul.u32 2, %s34
    $region9: #{dice_bce_loss.1} parent=1 // pred_fallthru
      _
    %s36 = sadd.s32 0, 0
    %p37 = scmp.lt.s32.totalorder %s36, 0
    %s38 = scalar_select %p37, %s36, 0
    %s39 = smul.u32 2, %s38
    %p40 = scmp.lt.s32.totalorder %s39, 1
    %s41 = scalar_select %p40, %s39, 1
    %s42 = smul.addr %s41, 8
    %s43 = scalar_lea.vmem %s0, %s42
    %s44 = sadd.s32 0, 0
    %p45 = scmp.lt.s32.totalorder %s44, 0
    %s46 = scalar_select %p45, %s44, 0
    %s47 = smul.u32 2, %s46
    %p48 = scmp.lt.s32.totalorder %s47, 1
    %s49 = scalar_select %p48, %s47, 1
    %s50 = smul.addr %s49, 8
    %s51 = scalar_lea.vmem %s1, %s50
    %s52 = sadd.s32 0, 0
    %p53 = scmp.lt.s32.totalorder %s52, 0
    %s54 = scalar_select %p53, %s52, 0
    %s55 = smul.u32 2, %s54
    %p56 = scmp.lt.s32.totalorder %s55, 1
    %s57 = scalar_select %p56, %s55, 1
    %s58 = smul.addr %s57, 8
    %s59 = scalar_lea.vmem %s0, %s58
    %s60 = sadd.s32 0, 0
    %p61 = scmp.lt.s32.totalorder %s60, 0
    %s62 = scalar_select %p61, %s60, 0
    %s63 = smul.u32 2, %s62
    %s64 = sadd.s32 0, 0
    %p65 = scmp.lt.s32.totalorder %s64, 0
    %s66 = scalar_select %p65, %s64, 0
    %s67 = smul.u32 2, %s66
    %p68 = scmp.lt.s32.totalorder %s67, 1
    %s69 = scalar_select %p68, %s67, 1
    %s70 = smul.addr %s69, 8
    %s71 = scalar_lea.vmem %s1, %s70
    %s72 = sadd.s32 0, 0
    %p73 = scmp.lt.s32.totalorder %s72, 0
    %s74 = scalar_select %p73, %s72, 0
    %s75 = smul.u32 2, %s74
    %p76 = scmp.eq.s32.totalorder 0, 0
    // Predicated region
    $region10: #{dice_bce_loss.1} parent=1 // pred_check
      %p77 = pneg %p76
    $region11: #{dice_bce_loss.1} parent=1 // pred_check_branch
      %79 = sbr.rel (%p77) target = $region13
    $region12: #{dice_bce_loss.1} parent=1 // pred_region
      %80 = vst [vmem:[#allocation2] sm:$0xff] 0.0
      %81 = vst [vmem:[#allocation3] sm:$0xff] 0.0
      %82 = vst [vmem:[#allocation4] sm:$0xff] 0.0
      %83 = vst [vmem:[#allocation5] sm:$0xff] 0.0
    $region13: #{dice_bce_loss.1} parent=1 // pred_fallthru
      _
    %v84 = vld [vmem:[%s59] sm:$0xff]
    %v85 = vld [vmem:[%s59 + $0x8] sm:$0xff]
    %v86 = vld [vmem:[%s71] sm:$0xff]
    %v87 = vld [vmem:[%s71 + $0x8] sm:$0xff]
    %v88 = vand.u32 2147483647, %v84
    %v89 = vand.u32 2147483647, %v85
    %v90 = vsub.f32 0.0, %v88
    %v91 = vsub.f32 0.0, %v89
    %v92 = vmul.f32 %v90, 1.442695
    %v93 = vpow.pop %v92
    %v94 = vmul.f32 %v91, 1.442695
    %v95 = vpow.pop %v94
    %v96 = vadd.f32 %v93, 1.0
    %v97 = vadd.f32 %v95, 1.0
    %v98 = vrcp.pop %v96
    %v99 = vrcp.pop %v97
    %vm100 = vcmp.ge.f32.partialorder %v84, 0.0
    %vm101 = vcmp.ge.f32.partialorder %v85, 0.0
    %v102 = vsel %vm100, 1.0, %v93
    %v103 = vsel %vm101, 1.0, %v95
    %v104 = vmul.f32 %v102, %v98
    %v105 = vmul.f32 %v103, %v99
    %v106 = vadd.f32 %v93, 1.0
    %v107 = vlog2.pop %v106
    %v108 = vmul.f32 %v107, 0.6931472
    %v109 = vmul.f32 -0.5, %v93
    %v110 = vadd.f32 %v109, 1.0
    %v111 = vmul.f32 %v110, %v93
    %v112 = vand.u32 2147483647, %v93
    %vm113 = vcmp.lt.f32.partialorder %v112, 0.0004427343
    %v114 = vsel %vm113, %v111, %v108
    %v115 = vadd.f32 %v95, 1.0
    %v116 = vlog2.pop %v115
    %v117 = vmul.f32 %v116, 0.6931472
    %v118 = vmul.f32 -0.5, %v95
    %v119 = vadd.f32 %v118, 1.0
    %v120 = vmul.f32 %v119, %v95
    %v121 = vand.u32 2147483647, %v95
    %vm122 = vcmp.lt.f32.partialorder %v121, 0.0004427343
    %v123 = vsel %vm122, %v120, %v117
    %v124 = vmax.f32 %v84, 0.0
    %v125 = vmax.f32 %v85, 0.0
    %v126 = vadd.f32 %v114, %v124
    %v127 = vadd.f32 %v123, %v125
    %v128 = vmul.f32 %v86, %v84
    %v129 = vmul.f32 %v87, %v85
    %v130 = vsub.f32 %v126, %v128
    %v131 = vsub.f32 %v127, %v129
    %v132 = vmul.f32 %v104, %v86
    %v133 = vmul.f32 %v105, %v87
    %v134 = vld [vmem:[#allocation2] sm:$0xff]
    %v135 = vadd.f32 %v132, %v133
    %v136 = vadd.f32 %v134, %v135
    %137 = vst [vmem:[#allocation2] sm:$0xff] %v136
    %v138 = vld [vmem:[#allocation3] sm:$0xff]
    %v139 = vadd.f32 %v104, %v105
    %v140 = vadd.f32 %v138, %v139
    %141 = vst [vmem:[#allocation3] sm:$0xff] %v140
    %v142 = vld [vmem:[#allocation4] sm:$0xff]
    %v143 = vadd.f32 %v86, %v87
    %v144 = vadd.f32 %v142, %v143
    %145 = vst [vmem:[#allocation4] sm:$0xff] %v144
    %v146 = vld [vmem:[#allocation5] sm:$0xff]
    %v147 = vadd.f32 %v130, %v131
    %v148 = vadd.f32 %v146, %v147
    %149 = vst [vmem:[#allocation5] sm:$0xff] %v148
    // Predicated region
    $region14: #{dice_bce_loss.1} parent=1 // pred_check
      %p150 = pneg %p76
    $region15: #{dice_bce_loss.1} parent=1 // pred_check_branch
      %152 = sbr.rel (%p150) target = $region17
    $region16: #{dice_bce_loss.1} parent=1 // pred_region
      %v153 = vld [vmem:[#allocation2] sm:$0xff]
      %154 = vadd.xlane.f32.xlu0 %v153
      %v155 = vpop.xlane.xlu0 %154
      %v156 = vrot.slane %v155, 4
      %v157 = vadd.f32 %v155, %v156
      %v158 = vrot.slane %v157, 2
      %v159 = vadd.f32 %v157, %v158
      %v160 = vrot.slane %v159, 1
      %v161 = vadd.f32 %v159, %v160
      %s162 = vtos %v161
      %s163 = scalar_lea.smem [#allocation6], 0
      %164 = sst [smem:[%s163]] %s162
      %v165 = vld [vmem:[#allocation3] sm:$0xff]
      %166 = vadd.xlane.f32.xlu0 %v165
      %v167 = vpop.xlane.xlu0 %166
      %v168 = vrot.slane %v167, 4
      %v169 = vadd.f32 %v167, %v168
      %v170 = vrot.slane %v169, 2
      %v171 = vadd.f32 %v169, %v170
      %v172 = vrot.slane %v171, 1
      %v173 = vadd.f32 %v171, %v172
      %s174 = vtos %v173
      %s175 = scalar_lea.smem [#allocation6], 1
      %176 = sst [smem:[%s175]] %s174
      %v177 = vld [vmem:[#allocation4] sm:$0xff]
      %178 = vadd.xlane.f32.xlu0 %v177
      %v179 = vpop.xlane.xlu0 %178
      %v180 = vrot.slane %v179, 4
      %v181 = vadd.f32 %v179, %v180
      %v182 = vrot.slane %v181, 2
      %v183 = vadd.f32 %v181, %v182
      %v184 = vrot.slane %v183, 1
      %v185 = vadd.f32 %v183, %v184
      %s186 = vtos %v185
      %s187 = scalar_lea.smem [#allocation6], 2
      %188 = sst [smem:[%s187]] %s186
      %v189 = vld [vmem:[#allocation5] sm:$0xff]
      %190 = vadd.xlane.f32.xlu0 %v189
      %v191 = vpop.xlane.xlu0 %190
      %v192 = vrot.slane %v191, 4
      %v193 = vadd.f32 %v191, %v192
      %v194 = vrot.slane %v193, 2
      %v195 = vadd.f32 %v193, %v194
      %v196 = vrot.slane %v195, 1
      %v197 = vadd.f32 %v195, %v196
      %s198 = vtos %v197
      %s199 = scalar_lea.smem [#allocation6], 3
      %200 = sst [smem:[%s199]] %s198
    $region17: #{dice_bce_loss.1} parent=1 // pred_fallthru
      _
    // Predicated region
    $region18: #{dice_bce_loss.1} parent=1 // pred_check
      _
    $region19: #{dice_bce_loss.1} parent=1 // pred_check_branch
      %202 = sbr.rel (0) target = $region21
    $region20: #{dice_bce_loss.1} parent=1 // pred_region
      %s204 = ssub.s32 16, 16
      %205 = vsyncadd [#allocation7], %s204
      %s207 = sshll.u32 %s2, 4
      %s208 = int_to_ptr.vmem [resolvable:$true] %s207
      %210 = dma.smem_to_vmem [#allocation6], 16, %s208, [#allocation7]
    $region21: #{dice_bce_loss.1} parent=1 // pred_fallthru
      _
    // Predicated region
    $region22: #{dice_bce_loss.1} parent=1 // pred_check
      _
    $region23: #{dice_bce_loss.1} parent=1 // pred_check_branch
      %212 = sbr.rel (0) target = $region25
    $region24: #{dice_bce_loss.1} parent=1 // pred_region
      %213 = dma.done [#allocation7], 16
    $region25: #{dice_bce_loss.1} parent=1 // pred_fallthru
      _
    %214 = sfence
    %215 = vsyncpa [#allocation7], 1

</llo_original>
